<compile_context>
chip_gen: v7x
topology: tpu7x:2x2x1
jax: 0.10.0
libtpu: 0.0.40
codegen_flags: <defaults>
</compile_context>

<pallas_src>
import functools

import jax
import jax.numpy as jnp
from jax import lax
from jax.experimental import pallas as pl
from jax.experimental.pallas import tpu as pltpu

BN_EPS = 1e-5
VMEM_LIMIT_BYTES = 32 * 1024 * 1024   # safe on v5e/v6e (128 MiB phys) and v7x (64 MiB phys)


def _choose_tile_m(hw, c_in, c_out, budget_bytes=4 * 1024 * 1024):
    """Pick a lane-tile size: multiple of 128 (or full extent), sized so that
    x-tile + out-tile, double-buffered, stays within a small VMEM budget."""
    bytes_per_lane = 4 * (c_in + c_out)            # f32 x lane + f32 out lane
    tm = budget_bytes // (2 * bytes_per_lane)      # x2: double buffering
    tm = min(tm, hw, 16384)
    if tm >= hw:
        return hw                                   # full extent is always legal
    return max(128, (tm // 128) * 128)


def _make_stats_kernel(hw, tm):
    """Phase 1: accumulate per-channel sum of x and Gram x x^T over all pixels."""
    ragged = (hw % tm) != 0

    def kernel(x_ref, sumx_ref, gram_ref):
        # x_ref: (C_in, TM) ; sumx_ref: (C_in, 1) ; gram_ref: (C_in, C_in)
        is_first = jnp.logical_and(pl.program_id(0) == 0, pl.program_id(1) == 0)

        @pl.when(is_first)
        def _():
            sumx_ref[...] = jnp.zeros_like(sumx_ref)
            gram_ref[...] = jnp.zeros_like(gram_ref)

        x = x_ref[...].astype(jnp.float32)
        if ragged:
            # Mask out-of-bounds lanes of the last (partial) M tile so garbage
            # reads never contaminate the global statistics.
            lane = lax.broadcasted_iota(jnp.int32, x.shape, 1)
            valid = hw - pl.program_id(1) * tm
            x = jnp.where(lane < valid, x, 0.0)

        sumx_ref[...] += jnp.sum(x, axis=1, keepdims=True)
        # Gram = x @ x^T, contracting the lane (pixel) axis on the MXU.
        gram_ref[...] += lax.dot_general(
            x, x, (((1,), (1,)), ((), ())), preferred_element_type=jnp.float32)

    return kernel


def _apply_kernel(w_ref, scale_ref, shift_ref, x_ref, o_ref):
    """Phase 2: relu(scale * (W @ x) + shift) on one (C_out, TM) tile."""
    conv = jnp.dot(w_ref[...], x_ref[...], preferred_element_type=jnp.float32)
    y = conv * scale_ref[...] + shift_ref[...]      # single FMA per element
    o_ref[...] = jnp.maximum(y, 0.0).astype(o_ref.dtype)


@functools.partial(jax.jit, static_argnames=())
def conv_emb_forward(x_nchw, weight, bias, gamma, beta):
    """x_nchw: (N, C_in, H, W) f32. weight: (C_out, C_in) (1x1 kernel squeezed),
    bias/gamma/beta: (C_out,). Returns (N, C_out, H, W) f32."""
    n, c_in, h, w = x_nchw.shape
    c_out = weight.shape[0]
    hw = h * w
    m_total = n * hw

    x3d = x_nchw.reshape(n, c_in, hw)               # free reshape (no transpose)
    tm = _choose_tile_m(hw, c_in, c_out)
    n_m = pl.cdiv(hw, tm)

    # ---- Phase 1: global x statistics (sum and Gram) ----------------------
    sum_x, gram = pl.pallas_call(
        _make_stats_kernel(hw, tm),
        out_shape=(jax.ShapeDtypeStruct((c_in, 1), jnp.float32),
                   jax.ShapeDtypeStruct((c_in, c_in), jnp.float32)),
        grid_spec=pltpu.PrefetchScalarGridSpec(
            num_scalar_prefetch=0,
            grid=(n, n_m),
            in_specs=[pl.BlockSpec((None, c_in, tm), lambda b, j: (b, 0, j))],
            out_specs=(pl.BlockSpec((c_in, 1), lambda b, j: (0, 0)),
                       pl.BlockSpec((c_in, c_in), lambda b, j: (0, 0))),
        ),
        compiler_params=pltpu.CompilerParams(
            dimension_semantics=("arbitrary", "arbitrary"),
            vmem_limit_bytes=VMEM_LIMIT_BYTES),
    )(x3d)

    # ---- Tiny glue math (C_in x C_in / C_out sized, plain JAX) ------------
    inv_m = 1.0 / float(m_total)
    mu_x = sum_x * inv_m                             # (C_in, 1)
    exx = gram * inv_m                               # (C_in, C_in)
    cov = exx - mu_x @ mu_x.T                        # (C_in, C_in)
    w_mu = weight @ mu_x                             # (C_out, 1) = W mu_x
    var_c = jnp.maximum(
        jnp.sum((weight @ cov) * weight, axis=1, keepdims=True), 0.0)  # (C_out,1)
    inv_std = lax.rsqrt(var_c + BN_EPS)
    scale = gamma.reshape(c_out, 1) * inv_std        # (C_out, 1)
    # conv bias is exactly cancelled by BN mean-subtraction, so it is folded
    # away here and never touched in the kernel.
    shift = beta.reshape(c_out, 1) - scale * w_mu    # (C_out, 1)
    del bias  # mathematically cancelled by BN centering

    # ---- Phase 2: fused conv + BN-affine + ReLU, tiled & double-buffered ---
    # TODO(synk): if production channel counts grow to >=128, cast x/W to bf16
    # for the MXU matmul (keep preferred_element_type=f32).
    out3d = pl.pallas_call(
        _apply_kernel,
        out_shape=jax.ShapeDtypeStruct((n, c_out, hw), jnp.float32),
        grid_spec=pltpu.PrefetchScalarGridSpec(
            num_scalar_prefetch=0,
            grid=(n, n_m),
            in_specs=[
                pl.BlockSpec((c_out, c_in), lambda b, j: (0, 0)),
                pl.BlockSpec((c_out, 1), lambda b, j: (0, 0)),
                pl.BlockSpec((c_out, 1), lambda b, j: (0, 0)),
                pl.BlockSpec((None, c_in, tm), lambda b, j: (b, 0, j)),
            ],
            out_specs=pl.BlockSpec((None, c_out, tm), lambda b, j: (b, 0, j)),
        ),
        compiler_params=pltpu.CompilerParams(
            dimension_semantics=("parallel", "parallel"),
            vmem_limit_bytes=VMEM_LIMIT_BYTES),
    )(weight, scale, shift, x3d)

    return out3d.reshape(n, c_out, h, w)             # free reshape back to NCHW


def conv_emb_reference(x_nchw, weight, bias, gamma, beta):
    """Pure-JAX reference: relu(bn_train(conv1x1(x)))."""
    n, c_in, h, w = x_nchw.shape
    c_out = weight.shape[0]
    x2d = jnp.transpose(x_nchw, (0, 2, 3, 1)).reshape(-1, c_in)
    conv = x2d @ weight.T + bias
    mean = jnp.mean(conv, axis=0, keepdims=True)
    var = jnp.mean((conv - mean) ** 2, axis=0, keepdims=True)
    y = gamma * (conv - mean) / jnp.sqrt(var + BN_EPS) + beta
    y = jnp.maximum(y, 0.0)
    return jnp.transpose(y.reshape(n, h, w, c_out), (0, 3, 1, 2))


if __name__ == "__main__":
    key = jax.random.PRNGKey(0)
    k_x, k_w, k_b, k_g, k_be = jax.random.split(key, 5)

    N, C_IN, H, W = 2, 4, 16, 16
    C_OUT = 8

    x = jax.random.normal(k_x, (N, C_IN, H, W), dtype=jnp.float32)

    # Shapes from nn.Conv2d(C_in, C_out, 1) / nn.BatchNorm2d(C_out); non-trivial
    # gamma/beta to exercise the affine path.
    weight = jax.random.normal(k_w, (C_OUT, C_IN), dtype=jnp.float32) * 0.1
    bias = jax.random.normal(k_b, (C_OUT,), dtype=jnp.float32) * 0.1
    gamma = 1.0 + 0.1 * jax.random.normal(k_g, (C_OUT,), dtype=jnp.float32)
    beta = 0.1 * jax.random.normal(k_be, (C_OUT,), dtype=jnp.float32)

    out = conv_emb_forward(x, weight, bias, gamma, beta)
    jax.block_until_ready(out)

    ref = conv_emb_reference(x, weight, bias, gamma, beta)
    assert out.shape == (N, C_OUT, H, W)
    assert jnp.allclose(out, ref, atol=1e-4, rtol=1e-4), (
        float(jnp.max(jnp.abs(out - ref))))

    print("KERNEL_OK")
</pallas_src>

<mosaic_0001>
module attributes {stable_mosaic.version = 11 : i64} {
  func.func @kernel(%arg0: i32, %arg1: i32, %arg2: memref<1x4x256xf32, #tpu.memory_space<vmem>>, %arg3: memref<4x1xf32, #tpu.memory_space<vmem>>, %arg4: memref<4x4xf32, #tpu.memory_space<vmem>>) attributes {dimension_semantics = [#tpu.dimension_semantics<arbitrary>, #tpu.dimension_semantics<arbitrary>], iteration_bounds = array<i64: 2, 1>, scalar_prefetch = 0 : i64, scratch_operands = 0 : i64, tpu.core_type = #tpu.core_type<tc>, window_params = [{transform_indices = @transform_0, window_bounds = array<i64: 1, 4, 256>}, {pipeline_mode = #tpu.pipeline_mode<synchronous>, transform_indices = @transform_1, window_bounds = array<i64: 4, 1>}, {pipeline_mode = #tpu.pipeline_mode<synchronous>, transform_indices = @transform_2, window_bounds = array<i64: 4, 4>}]} {
    %c0_i32 = arith.constant 0 : i32
    %0 = arith.cmpi eq, %arg0, %c0_i32 : i32
    %c0_i32_0 = arith.constant 0 : i32
    %1 = arith.cmpi eq, %arg1, %c0_i32_0 : i32
    %2 = arith.andi %0, %1 : i1
    %3 = arith.extui %2 : i1 to i32
    %c0_i32_1 = arith.constant 0 : i32
    %4 = arith.cmpi ne, %3, %c0_i32_1 : i32
    scf.if %4 {
      %cst_13 = arith.constant 0.000000e+00 : f32
      %16 = vector.broadcast %cst_13 : f32 to vector<4x1xf32>
      %c0_14 = arith.constant 0 : index
      %c0_15 = arith.constant 0 : index
      %17 = vector.load %arg3[%c0_14, %c0_15] : memref<4x1xf32, #tpu.memory_space<vmem>>, vector<4x1xf32>
      tpu.vector_store %arg3[%c0_14, %c0_15], %16 {strides = array<i32>} : memref<4x1xf32, #tpu.memory_space<vmem>>, vector<4x1xf32>,
      %cst_16 = arith.constant 0.000000e+00 : f32
      %18 = vector.broadcast %cst_16 : f32 to vector<4x4xf32>
      %c0_17 = arith.constant 0 : index
      %c0_18 = arith.constant 0 : index
      %19 = vector.load %arg4[%c0_17, %c0_18] : memref<4x4xf32, #tpu.memory_space<vmem>>, vector<4x4xf32>
      tpu.vector_store %arg4[%c0_17, %c0_18], %18 {strides = array<i32>} : memref<4x4xf32, #tpu.memory_space<vmem>>, vector<4x4xf32>,
    } else {
    }
    %c0 = arith.constant 0 : index
    %c0_2 = arith.constant 0 : index
    %c0_3 = arith.constant 0 : index
    %5 = vector.load %arg2[%c0, %c0_2, %c0_3] : memref<1x4x256xf32, #tpu.memory_space<vmem>>, vector<1x4x256xf32>
    %6 = vector.shape_cast %5 : vector<1x4x256xf32> to vector<4x256xf32>
    %c0_4 = arith.constant 0 : index
    %c0_5 = arith.constant 0 : index
    %7 = vector.load %arg3[%c0_4, %c0_5] : memref<4x1xf32, #tpu.memory_space<vmem>>, vector<4x1xf32>
    %cst = arith.constant dense<0.000000e+00> : vector<4xf32>
    %8 = vector.multi_reduction <add>, %6, %cst [1] : vector<4x256xf32> to vector<4xf32>
    %9 = vector.shape_cast %8 : vector<4xf32> to vector<4x1xf32>
    %10 = arith.addf %7, %9 : vector<4x1xf32>
    %c0_6 = arith.constant 0 : index
    %c0_7 = arith.constant 0 : index
    %11 = vector.load %arg3[%c0_6, %c0_7] : memref<4x1xf32, #tpu.memory_space<vmem>>, vector<4x1xf32>
    tpu.vector_store %arg3[%c0_6, %c0_7], %10 {strides = array<i32>} : memref<4x1xf32, #tpu.memory_space<vmem>>, vector<4x1xf32>,
    %c0_8 = arith.constant 0 : index
    %c0_9 = arith.constant 0 : index
    %12 = vector.load %arg4[%c0_8, %c0_9] : memref<4x4xf32, #tpu.memory_space<vmem>>, vector<4x4xf32>
    %cst_10 = arith.constant dense<0.000000e+00> : vector<4x4xf32>
    %13 = tpu.matmul %6, %6, %cst_10 {dimension_numbers = #tpu.dot_dimension_numbers<[1], [1], [0], [0], [0, 0, 1, 0], [], []>} : vector<4x256xf32>, vector<4x256xf32>, vector<4x4xf32> -> vector<4x4xf32>
    %14 = arith.addf %12, %13 : vector<4x4xf32>
    %c0_11 = arith.constant 0 : index
    %c0_12 = arith.constant 0 : index
    %15 = vector.load %arg4[%c0_11, %c0_12] : memref<4x4xf32, #tpu.memory_space<vmem>>, vector<4x4xf32>
    tpu.vector_store %arg4[%c0_11, %c0_12], %14 {strides = array<i32>} : memref<4x4xf32, #tpu.memory_space<vmem>>, vector<4x4xf32>,
    return
  }
  func.func @transform_0(%arg0: i32, %arg1: i32) -> (i32, i32, i32) {
    %c0_i32 = arith.constant 0 : i32
    %c0_i32_0 = arith.constant 0 : i32
    return %arg0, %c0_i32, %arg1 : i32, i32, i32
  }
  func.func @transform_1(%arg0: i32, %arg1: i32) -> (i32, i32) {
    %c0_i32 = arith.constant 0 : i32
    %c0_i32_0 = arith.constant 0 : i32
    %c0_i32_1 = arith.constant 0 : i32
    return %c0_i32, %c0_i32_0 : i32, i32
  }
  func.func @transform_2(%arg0: i32, %arg1: i32) -> (i32, i32) {
    %c0_i32 = arith.constant 0 : i32
    %c0_i32_0 = arith.constant 0 : i32
    %c0_i32_1 = arith.constant 0 : i32
    return %c0_i32, %c0_i32_0 : i32, i32
  }
}

module attributes {stable_mosaic.version = 11 : i64} {
  func.func @_apply_kernel(%arg0: i32, %arg1: i32, %arg2: memref<8x4xf32, #tpu.memory_space<vmem>>, %arg3: memref<8x1xf32, #tpu.memory_space<vmem>>, %arg4: memref<8x1xf32, #tpu.memory_space<vmem>>, %arg5: memref<1x4x256xf32, #tpu.memory_space<vmem>>, %arg6: memref<1x8x256xf32, #tpu.memory_space<vmem>>) attributes {dimension_semantics = [#tpu.dimension_semantics<parallel>, #tpu.dimension_semantics<parallel>], iteration_bounds = array<i64: 2, 1>, scalar_prefetch = 0 : i64, scratch_operands = 0 : i64, tpu.core_type = #tpu.core_type<tc>, window_params = [{pipeline_mode = #tpu.pipeline_mode<synchronous>, transform_indices = @transform_0, window_bounds = array<i64: 8, 4>}, {pipeline_mode = #tpu.pipeline_mode<synchronous>, transform_indices = @transform_1, window_bounds = array<i64: 8, 1>}, {pipeline_mode = #tpu.pipeline_mode<synchronous>, transform_indices = @transform_2, window_bounds = array<i64: 8, 1>}, {transform_indices = @transform_3, window_bounds = array<i64: 1, 4, 256>}, {transform_indices = @transform_4, window_bounds = array<i64: 1, 8, 256>}]} {
    %c0 = arith.constant 0 : index
    %c0_0 = arith.constant 0 : index
    %0 = vector.load %arg2[%c0, %c0_0] : memref<8x4xf32, #tpu.memory_space<vmem>>, vector<8x4xf32>
    %c0_1 = arith.constant 0 : index
    %c0_2 = arith.constant 0 : index
    %c0_3 = arith.constant 0 : index
    %1 = vector.load %arg5[%c0_1, %c0_2, %c0_3] : memref<1x4x256xf32, #tpu.memory_space<vmem>>, vector<1x4x256xf32>
    %2 = vector.shape_cast %1 : vector<1x4x256xf32> to vector<4x256xf32>
    %cst = arith.constant dense<0.000000e+00> : vector<8x256xf32>
    %3 = tpu.matmul %0, %2, %cst {dimension_numbers = #tpu.dot_dimension_numbers<[1], [0], [0], [1], [0, 0, 1, 1], [], []>} : vector<8x4xf32>, vector<4x256xf32>, vector<8x256xf32> -> vector<8x256xf32>
    %c0_4 = arith.constant 0 : index
    %c0_5 = arith.constant 0 : index
    %4 = vector.load %arg3[%c0_4, %c0_5] : memref<8x1xf32, #tpu.memory_space<vmem>>, vector<8x1xf32>
    %5 = vector.broadcast %4 : vector<8x1xf32> to vector<8x256xf32>
    %6 = arith.mulf %3, %5 : vector<8x256xf32>
    %c0_6 = arith.constant 0 : index
    %c0_7 = arith.constant 0 : index
    %7 = vector.load %arg4[%c0_6, %c0_7] : memref<8x1xf32, #tpu.memory_space<vmem>>, vector<8x1xf32>
    %8 = vector.broadcast %7 : vector<8x1xf32> to vector<8x256xf32>
    %9 = arith.addf %6, %8 : vector<8x256xf32>
    %cst_8 = arith.constant 0.000000e+00 : f32
    %10 = vector.broadcast %cst_8 : f32 to vector<8x256xf32>
    %11 = arith.maximumf %9, %10 : vector<8x256xf32>
    %c0_9 = arith.constant 0 : index
    %c0_10 = arith.constant 0 : index
    %c0_11 = arith.constant 0 : index
    %12 = vector.load %arg6[%c0_9, %c0_10, %c0_11] : memref<1x8x256xf32, #tpu.memory_space<vmem>>, vector<1x8x256xf32>
    %13 = vector.shape_cast %12 : vector<1x8x256xf32> to vector<8x256xf32>
    %14 = vector.shape_cast %11 : vector<8x256xf32> to vector<1x8x256xf32>
    tpu.vector_store %arg6[%c0_9, %c0_10, %c0_11], %14 {strides = array<i32>} : memref<1x8x256xf32, #tpu.memory_space<vmem>>, vector<1x8x256xf32>,
    return
  }
  func.func @transform_0(%arg0: i32, %arg1: i32) -> (i32, i32) {
    %c0_i32 = arith.constant 0 : i32
    %c0_i32_0 = arith.constant 0 : i32
    %c0_i32_1 = arith.constant 0 : i32
    return %c0_i32, %c0_i32_0 : i32, i32
  }
  func.func @transform_1(%arg0: i32, %arg1: i32) -> (i32, i32) {
    %c0_i32 = arith.constant 0 : i32
    %c0_i32_0 = arith.constant 0 : i32
    %c0_i32_1 = arith.constant 0 : i32
    return %c0_i32, %c0_i32_0 : i32, i32
  }
  func.func @transform_2(%arg0: i32, %arg1: i32) -> (i32, i32) {
    %c0_i32 = arith.constant 0 : i32
    %c0_i32_0 = arith.constant 0 : i32
    %c0_i32_1 = arith.constant 0 : i32
    return %c0_i32, %c0_i32_0 : i32, i32
  }
  func.func @transform_3(%arg0: i32, %arg1: i32) -> (i32, i32, i32) {
    %c0_i32 = arith.constant 0 : i32
    %c0_i32_0 = arith.constant 0 : i32
    return %arg0, %c0_i32, %arg1 : i32, i32, i32
  }
  func.func @transform_4(%arg0: i32, %arg1: i32) -> (i32, i32, i32) {
    %c0_i32 = arith.constant 0 : i32
    %c0_i32_0 = arith.constant 0 : i32
    return %arg0, %c0_i32, %arg1 : i32, i32, i32
  }
}

</mosaic_0001>

<llo_original>
// kernel: conv_emb_forward.2
$region0: #{conv_emb_forward.2}
  #allocation0 [shape = 'u32[]', space=smem, size = 0x4, offset = 0x4, fixed_abs, tag = 'smem constant byte address 0x4 - core index']
  #allocation1 [shape = 'u32[144,128]{1,0:T(1,128)}', space=vmem, size = 0x12000, scoped, tag = 'internal scratch']
  %s0 = inlined_call_operand.vmem [shape: f32[2,4,256], index: 0, kind: input, shape index: {}]
  %s1 = inlined_call_operand.vmem [shape: f32[4,1], index: 1, kind: output, shape index: {0}]
  %s2 = inlined_call_operand.vmem [shape: f32[4,4], index: 2, kind: output, shape index: {1}]
  %3 = xla_tuple %s1, %s2
  %s4 = sld [smem:[#allocation0]]
  $region49: #{conv_emb_forward.2} parent=0
    _
  %s6 = ssub.s32 1, %s4
  %s7 = scalar_select 0, %s6, %s4
  loop: start=0, step=1, limit=4
  $region2: #{conv_emb_forward.2} parent=0 // loop_pre_header
    _
  $region3: #{conv_emb_forward.2} parent=0 // loop_header
    %s9 = sphi 0, %s13
    %p10 = scmp.ge.s32.totalorder %s9, 4
    %s16 = sphi 0, %s28
    %s17 = sphi 0, %s24
    %s18 = sphi 0, %s16
    %s19 = sphi 0, %s17
    %s20 = sphi 0, %s18
    %s21 = sphi 0, %s19
    %s33 = sphi 0, %s35
    %s36 = sphi 0, %s33
    %s37 = sphi 0, %s36
    %s53 = sphi 0, %s37
    %s57 = sphi 0, %s57
    %s59 = sphi 0, %s57
    %s60 = sphi 0, %s59
    %s74 = sphi 0, %s60
    %s78 = sphi 0, %s78
    %s80 = sphi 0, %s78
    %s81 = sphi 0, %s80
    %s95 = sphi 0, %s81
  $region4: #{conv_emb_forward.2} parent=0 // loop_header_branch
    %12 = sbr.rel (%p10) target = $region8
  $region5: #{conv_emb_forward.2} parent=0 // loop_body
    %s14 = ssub.s32 %s9, 1
    %s15 = ssub.s32 %s9, 2
    %s22 = sadd.s32 1, %s17
    %p23 = scmp.ge.s32.totalorder %s22, 1
    %s24 = scalar_select %p23, 0, %s22
    %s25 = sadd.s32 1, %s16
    %s26 = scalar_select %p23, %s25, %s16
    %p27 = scmp.ge.s32.totalorder %s26, 2
    %s28 = scalar_select %p27, 0, %s26
    %s29 = ssub.s32 %s16, %s28
    %s30 = ssub.s32 %s17, %s24
    %s31 = sor.u32 %s29, %s30
    %p32 = scmp.eq.s32.totalorder %s31, 0
    %s34 = sadd.s32 %s33, 1
    %s35 = scalar_select %p32, %s33, %s34
    %p38 = pneg %p32
    %p39 = scmp.eq.s32.totalorder %s9, 1
    %p40 = por %p38, %p39
    %p41 = scmp.ne.s32.totalorder %s33, %s36
    %p42 = scmp.eq.s32.totalorder %s9, 0
    %p43 = por %p41, %p42
    %p44 = scmp.ne.s32.totalorder %s33, %s36
    %p45 = scmp.eq.s32.totalorder %s14, 1
    %p46 = por %p44, %p45
    %p47 = scmp.ne.s32.totalorder %s36, %s37
    %p48 = scmp.eq.s32.totalorder %s14, 0
    %p49 = por %p47, %p48
    %p50 = scmp.ne.s32.totalorder %s36, %s37
    %p51 = scmp.eq.s32.totalorder %s15, 1
    %p52 = por %p50, %p51
    %p54 = scmp.ne.s32.totalorder %s37, %s53
    %p55 = scmp.eq.s32.totalorder %s15, 0
    %p56 = por %p54, %p55
    %s58 = sadd.s32 %s57, 1
    %p61 = scmp.eq.s32.totalorder %s9, 1
    %p62 = scmp.ne.s32.totalorder %s57, %s59
    %p63 = scmp.eq.s32.totalorder %s9, 0
    %p64 = por %p62, %p63
    %p65 = scmp.ne.s32.totalorder %s57, %s59
    %p66 = scmp.eq.s32.totalorder %s14, 1
    %p67 = por %p65, %p66
    %p68 = scmp.ne.s32.totalorder %s59, %s60
    %p69 = scmp.eq.s32.totalorder %s14, 0
    %p70 = por %p68, %p69
    %p71 = scmp.ne.s32.totalorder %s59, %s60
    %p72 = scmp.eq.s32.totalorder %s15, 1
    %p73 = por %p71, %p72
    %p75 = scmp.ne.s32.totalorder %s60, %s74
    %p76 = scmp.eq.s32.totalorder %s15, 0
    %p77 = por %p75, %p76
    %s79 = sadd.s32 %s78, 1
    %p82 = scmp.eq.s32.totalorder %s9, 1
    %p83 = scmp.ne.s32.totalorder %s78, %s80
    %p84 = scmp.eq.s32.totalorder %s9, 0
    %p85 = por %p83, %p84
    %p86 = scmp.ne.s32.totalorder %s78, %s80
    %p87 = scmp.eq.s32.totalorder %s14, 1
    %p88 = por %p86, %p87
    %p89 = scmp.ne.s32.totalorder %s80, %s81
    %p90 = scmp.eq.s32.totalorder %s14, 0
    %p91 = por %p89, %p90
    %p92 = scmp.ne.s32.totalorder %s80, %s81
    %p93 = scmp.eq.s32.totalorder %s15, 1
    %p94 = por %p92, %p93
    %p96 = scmp.ne.s32.totalorder %s81, %s95
    %p97 = scmp.eq.s32.totalorder %s15, 0
    %p98 = por %p96, %p97
    %p99 = scmp.le.s32.totalorder 1, %s9
    %p100 = scmp.lt.s32.totalorder %s9, 3
    %p101 = pnand %p99, %p100
    %p102 = pneg %p101
    // Predicated region
    $region9: #{conv_emb_forward.2} parent=5 // pred_check
      _
    $region10: #{conv_emb_forward.2} parent=5 // pred_check_branch
      %104 = sbr.rel (%p101) target = $region12
    $region11: #{conv_emb_forward.2} parent=5 // pred_region
      %s105 = ssub.s32 %s9, 1
    $region12: #{conv_emb_forward.2} parent=5 // pred_fallthru
      _
    %p106 = scmp.lt.s32.totalorder %s9, 2
    // Predicated region
    $region13: #{conv_emb_forward.2} parent=5 // pred_check
      %p107 = pneg %p106
    $region14: #{conv_emb_forward.2} parent=5 // pred_check_branch
      %109 = sbr.rel (%p107) target = $region16
    $region15: #{conv_emb_forward.2} parent=5 // pred_region
      // Predicated region
      $region17: #{conv_emb_forward.2} parent=15 // pred_check
        %p110 = pneg %p43
      $region18: #{conv_emb_forward.2} parent=15 // pred_check_branch
        %112 = sbr.rel (%p110) target = $region20
      $region19: #{conv_emb_forward.2} parent=15 // pred_region
        %s113 = smul.u32 2, %s17
        %p114 = scmp.lt.s32.totalorder %s16, 1
        %s115 = scalar_select %p114, %s16, 1
        %p116 = scmp.lt.s32.totalorder %s113, 1
        %s117 = scalar_select %p116, %s113, 1
        %s118 = smul.addr %s115, 2
        %s119 = sadd.s32 %s117, %s118
        %s120 = smul.addr %s119, 4
        %s121 = scalar_lea.vmem %s0, %s120
        %s122 = smul.u32 2, %s17
      $region20: #{conv_emb_forward.2} parent=15 // pred_fallthru
        _
    $region16: #{conv_emb_forward.2} parent=5 // pred_fallthru
      _
    %p123 = scmp.le.s32.totalorder 1, %s9
    %p124 = scmp.lt.s32.totalorder %s9, 3
    %p125 = pnand %p123, %p124
    %p126 = pneg %p125
    // Predicated region
    $region21: #{conv_emb_forward.2} parent=5 // pred_check
      _
    $region22: #{conv_emb_forward.2} parent=5 // pred_check_branch
      %128 = sbr.rel (%p125) target = $region24
    $region23: #{conv_emb_forward.2} parent=5 // pred_region
      %s129 = ssub.s32 %s9, 1
      %s130 = smul.u32 2, %s19
      %p131 = scmp.lt.s32.totalorder %s18, 1
      %s132 = scalar_select %p131, %s18, 1
      %p133 = scmp.lt.s32.totalorder %s130, 1
      %s134 = scalar_select %p133, %s130, 1
      %s135 = smul.addr %s132, 2
      %s136 = sadd.s32 %s134, %s135
      %s137 = smul.addr %s136, 4
      %s138 = scalar_lea.vmem %s0, %s137
      %p139 = pneg %p49
      %p140 = pneg %p46
      %p141 = pneg %p70
      %p142 = pneg %p67
      %p143 = pneg %p91
      %p144 = pneg %p88
      %s145 = smul.u32 2, %s19
      %p146 = scmp.lt.s32.totalorder %s18, 1
      %s147 = scalar_select %p146, %s18, 1
      %p148 = scmp.lt.s32.totalorder %s145, 1
      %s149 = scalar_select %p148, %s145, 1
      %s150 = smul.addr %s147, 2
      %s151 = sadd.s32 %s149, %s150
      %s152 = smul.addr %s151, 4
      %s153 = scalar_lea.vmem %s0, %s152
      %s154 = smul.u32 2, %s19
      %p155 = scmp.eq.s32.totalorder %s18, 0
      %p156 = scmp.eq.s32.totalorder %s19, 0
      %p157 = pnand %p155, %p156
      %p158 = pneg %p157
      // Predicated region
      $region25: #{conv_emb_forward.2} parent=23 // pred_check
        _
      $region26: #{conv_emb_forward.2} parent=23 // pred_check_branch
        %160 = sbr.rel (%p157) target = $region28
      $region27: #{conv_emb_forward.2} parent=23 // pred_region
        %vm161 = vcmask 3072
        %162 = vst.msk [vmem:[%s1] sm:$0xf] %vm161, 0.0
        %vm163 = vcmask 27648
        %164 = vst.msk [vmem:[%s2] sm:$0xf] %vm163, 0.0
      $region28: #{conv_emb_forward.2} parent=23 // pred_fallthru
        _
      %v165 = vld [vmem:[%s153] sm:$0xff]
      %v166 = vld [vmem:[%s1] sm:$0xf]
      %v168 = vcombine.high %v165, %v165
      %vm170 = vcmask 1043456
      %v171 = vsel %vm170, %v165, 0.0
      %v172 = vsel %vm170, %v168, 0.0
      %v173 = vadd.f32 %v171, %v172
      %174 = vadd.xlane.f32.xlu0 %v173
      %v175 = vpop.xlane.xlu0 %174
      %v176 = vadd.f32 %v166, %v175
      %vm177 = vcmask 3072
      %178 = vst.msk [vmem:[%s1] sm:$0xf] %vm177, %v176
      %v179 = vld [vmem:[%s2] sm:$0xf]
      %180 = vmatprep.subr.mxu0 %v168
      %181 = vmatpush1.xpose.msra.mxu0 %v165
      %182 = vmatprep.subr.mxu0 0.0
      %183 = vmatpush1.xpose.msra.mxu0 0.0
      %184 = vmatprep.subr.mxu0 0.0
      %185 = vmatpush1.xpose.msra.mxu0 0.0
      %186 = vmatprep.subr.mxu0 0.0
      %187 = vmatpush1.xpose.msra.mxu0 0.0
      %188 = vmatprep.subr.mxu0 0.0
      %189 = vmatpush1.xpose.msra.mxu0 0.0
      %190 = vmatprep.subr.mxu0 0.0
      %191 = vmatpush1.xpose.msra.mxu0 0.0
      %192 = vmatprep.subr.mxu0 0.0
      %193 = vmatpush1.xpose.msra.mxu0 0.0
      %194 = vmatprep.subr.mxu0 0.0
      %195 = vmatpush1.xpose.msra.mxu0 0.0
      %196 = vmatprep.subr.mxu0 0.0
      %197 = vmatpush1.xpose.msra.mxu0 0.0
      %198 = vmatprep.subr.mxu0 0.0
      %199 = vmatpush1.xpose.msra.mxu0 0.0
      %200 = vmatprep.subr.mxu0 0.0
      %201 = vmatpush1.xpose.msra.mxu0 0.0
      %202 = vmatprep.subr.mxu0 0.0
      %203 = vmatpush1.xpose.msra.mxu0 0.0
      %204 = vmatprep.subr.mxu0 0.0
      %205 = vmatpush1.xpose.msra.mxu0 0.0
      %206 = vmatprep.subr.mxu0 0.0
      %207 = vmatpush1.xpose.msra.mxu0 0.0
      %208 = vmatprep.subr.mxu0 0.0
      %209 = vmatpush1.xpose.msra.mxu0 0.0
      %210 = vmatprep.subr.mxu0 0.0
      %211 = vmatpush1.xpose.msra.mxu0 0.0
      %212 = vmatprep.subr.mxu0 0.0
      %213 = vmatpush1.xpose.msra.mxu0 0.0
      %214 = vmatprep.subr.mxu0 0.0
      %215 = vmatpush1.xpose.msra.mxu0 0.0
      %216 = vmatprep.subr.mxu0 0.0
      %217 = vmatpush1.xpose.msra.mxu0 0.0
      %218 = vmatprep.subr.mxu0 0.0
      %219 = vmatpush1.xpose.msra.mxu0 0.0
      %220 = vmatprep.subr.mxu0 0.0
      %221 = vmatpush1.xpose.msra.mxu0 0.0
      %222 = vmatprep.subr.mxu0 0.0
      %223 = vmatpush1.xpose.msra.mxu0 0.0
      %224 = vmatprep.subr.mxu0 0.0
      %225 = vmatpush1.xpose.msra.mxu0 0.0
      %226 = vmatprep.subr.mxu0 0.0
      %227 = vmatpush1.xpose.msra.mxu0 0.0
      %228 = vmatprep.subr.mxu0 0.0
      %229 = vmatpush1.xpose.msra.mxu0 0.0
      %230 = vmatprep.subr.mxu0 0.0
      %231 = vmatpush1.xpose.msra.mxu0 0.0
      %232 = vmatprep.subr.mxu0 0.0
      %233 = vmatpush1.xpose.msra.mxu0 0.0
      %234 = vmatprep.subr.mxu0 0.0
      %235 = vmatpush1.xpose.msra.mxu0 0.0
      %236 = vmatprep.subr.mxu0 0.0
      %237 = vmatpush1.xpose.msra.mxu0 0.0
      %238 = vmatprep.subr.mxu0 0.0
      %239 = vmatpush1.xpose.msra.mxu0 0.0
      %240 = vmatprep.subr.mxu0 0.0
      %241 = vmatpush1.xpose.msra.mxu0 0.0
      %242 = vmatprep.subr.mxu0 0.0
      %243 = vmatpush1.xpose.msra.mxu0 0.0
      %244 = vmatprep.mubr.f32.mxu0 %v168
      %245 = vmatmul.mubr.f32.gmra.mrb[0].mxu0 %v165
      %v246 = vpop.f32.mrb[0].mxu0
      %v247 = vadd.f32 0.0, %v246
      %v248 = vpop.f32.mrb[0].mxu0
      %249 = vdwg.mxu0
      %v250 = vadd.f32 %v179, %v247
      %vm251 = vcmask 27648
      %252 = vst.msk [vmem:[%s2] sm:$0xf] %vm251, %v250
      // Predicated region
      $region29: #{conv_emb_forward.2} parent=23 // pred_check
        %p253 = pneg %p67
      $region30: #{conv_emb_forward.2} parent=23 // pred_check_branch
        %255 = sbr.rel (%p253) target = $region32
      $region31: #{conv_emb_forward.2} parent=23 // pred_region
        _
      $region32: #{conv_emb_forward.2} parent=23 // pred_fallthru
        _
      // Predicated region
      $region33: #{conv_emb_forward.2} parent=23 // pred_check
        %p256 = pneg %p88
      $region34: #{conv_emb_forward.2} parent=23 // pred_check_branch
        %258 = sbr.rel (%p256) target = $region36
      $region35: #{conv_emb_forward.2} parent=23 // pred_region
        _
      $region36: #{conv_emb_forward.2} parent=23 // pred_fallthru
        _
      // Predicated region
      $region37: #{conv_emb_forward.2} parent=23 // pred_check
        %p259 = pneg %p67
      $region38: #{conv_emb_forward.2} parent=23 // pred_check_branch
        %261 = sbr.rel (%p259) target = $region40
      $region39: #{conv_emb_forward.2} parent=23 // pred_region
        _
      $region40: #{conv_emb_forward.2} parent=23 // pred_fallthru
        _
      // Predicated region
      $region41: #{conv_emb_forward.2} parent=23 // pred_check
        %p262 = pneg %p88
      $region42: #{conv_emb_forward.2} parent=23 // pred_check_branch
        %264 = sbr.rel (%p262) target = $region44
      $region43: #{conv_emb_forward.2} parent=23 // pred_region
        _
      $region44: #{conv_emb_forward.2} parent=23 // pred_fallthru
        _
    $region24: #{conv_emb_forward.2} parent=5 // pred_fallthru
      _
    %p265 = scmp.le.s32.totalorder 2, %s9
    // Predicated region
    $region45: #{conv_emb_forward.2} parent=5 // pred_check
      %p266 = pneg %p265
    $region46: #{conv_emb_forward.2} parent=5 // pred_check_branch
      %268 = sbr.rel (%p266) target = $region48
    $region47: #{conv_emb_forward.2} parent=5 // pred_region
      %s269 = ssub.s32 %s9, 2
    $region48: #{conv_emb_forward.2} parent=5 // pred_fallthru
      _
  $region6: #{conv_emb_forward.2} parent=0 // loop_footer
    %s13 = sadd.s32 1, %s9
  $region7: #{conv_emb_forward.2} parent=0 // loop_footer_branch
    %8 = sbr.rel target = $region3
  $region8: #{conv_emb_forward.2} parent=0 // loop_exit
    _

// kernel: conv_emb_forward.3
$region0: #{conv_emb_forward.3}
  #allocation0 [shape = 'u32[]', space=smem, size = 0x4, offset = 0x4, fixed_abs, tag = 'smem constant byte address 0x4 - core index']
  #allocation1 [shape = 'u32[144,128]{1,0:T(1,128)}', space=vmem, size = 0x12000, scoped, tag = 'internal scratch']
  %s0 = inlined_call_operand.vmem [shape: f32[8,4], index: 0, kind: input, shape index: {}]
  %s1 = inlined_call_operand.vmem [shape: f32[8,1], index: 1, kind: input, shape index: {}]
  %s2 = inlined_call_operand.vmem [shape: f32[8,1], index: 2, kind: input, shape index: {}]
  %s3 = inlined_call_operand.vmem [shape: f32[2,4,256], index: 3, kind: input, shape index: {}]
  %s4 = inlined_call_operand.vmem [shape: f32[2,8,256], index: 4, kind: output, shape index: {}]
  %s5 = sld [smem:[#allocation0]]
  $region49: #{conv_emb_forward.3} parent=0
    _
  %s7 = ssub.s32 1, %s5
  %s8 = scalar_select 0, %s7, %s5
  loop: start=0, step=1, limit=4
  $region2: #{conv_emb_forward.3} parent=0 // loop_pre_header
    _
  $region3: #{conv_emb_forward.3} parent=0 // loop_header
    %s10 = sphi 0, %s14
    %p11 = scmp.ge.s32.totalorder %s10, 4
    %s17 = sphi 0, %s29
    %s18 = sphi 0, %s25
    %s19 = sphi 0, %s17
    %s20 = sphi 0, %s18
    %s21 = sphi 0, %s19
    %s22 = sphi 0, %s20
    %s30 = sphi 0, %s30
    %s32 = sphi 0, %s30
    %s33 = sphi 0, %s32
    %s47 = sphi 0, %s33
    %s51 = sphi 0, %s51
    %s53 = sphi 0, %s51
    %s54 = sphi 0, %s53
    %s68 = sphi 0, %s54
    %s72 = sphi 0, %s72
    %s74 = sphi 0, %s72
    %s75 = sphi 0, %s74
    %s89 = sphi 0, %s75
    %s97 = sphi 0, %s99
    %s100 = sphi 0, %s97
    %s101 = sphi 0, %s100
    %s117 = sphi 0, %s101
    %s125 = sphi 0, %s127
    %s128 = sphi 0, %s125
    %s129 = sphi 0, %s128
    %s145 = sphi 0, %s129
  $region4: #{conv_emb_forward.3} parent=0 // loop_header_branch
    %13 = sbr.rel (%p11) target = $region8
  $region5: #{conv_emb_forward.3} parent=0 // loop_body
    %s15 = ssub.s32 %s10, 1
    %s16 = ssub.s32 %s10, 2
    %s23 = sadd.s32 1, %s18
    %p24 = scmp.ge.s32.totalorder %s23, 1
    %s25 = scalar_select %p24, 0, %s23
    %s26 = sadd.s32 1, %s17
    %s27 = scalar_select %p24, %s26, %s17
    %p28 = scmp.ge.s32.totalorder %s27, 2
    %s29 = scalar_select %p28, 0, %s27
    %s31 = sadd.s32 %s30, 1
    %p34 = scmp.eq.s32.totalorder %s10, 1
    %p35 = scmp.ne.s32.totalorder %s30, %s32
    %p36 = scmp.eq.s32.totalorder %s10, 0
    %p37 = por %p35, %p36
    %p38 = scmp.ne.s32.totalorder %s30, %s32
    %p39 = scmp.eq.s32.totalorder %s15, 1
    %p40 = por %p38, %p39
    %p41 = scmp.ne.s32.totalorder %s32, %s33
    %p42 = scmp.eq.s32.totalorder %s15, 0
    %p43 = por %p41, %p42
    %p44 = scmp.ne.s32.totalorder %s32, %s33
    %p45 = scmp.eq.s32.totalorder %s16, 1
    %p46 = por %p44, %p45
    %p48 = scmp.ne.s32.totalorder %s33, %s47
    %p49 = scmp.eq.s32.totalorder %s16, 0
    %p50 = por %p48, %p49
    %s52 = sadd.s32 %s51, 1
    %p55 = scmp.eq.s32.totalorder %s10, 1
    %p56 = scmp.ne.s32.totalorder %s51, %s53
    %p57 = scmp.eq.s32.totalorder %s10, 0
    %p58 = por %p56, %p57
    %p59 = scmp.ne.s32.totalorder %s51, %s53
    %p60 = scmp.eq.s32.totalorder %s15, 1
    %p61 = por %p59, %p60
    %p62 = scmp.ne.s32.totalorder %s53, %s54
    %p63 = scmp.eq.s32.totalorder %s15, 0
    %p64 = por %p62, %p63
    %p65 = scmp.ne.s32.totalorder %s53, %s54
    %p66 = scmp.eq.s32.totalorder %s16, 1
    %p67 = por %p65, %p66
    %p69 = scmp.ne.s32.totalorder %s54, %s68
    %p70 = scmp.eq.s32.totalorder %s16, 0
    %p71 = por %p69, %p70
    %s73 = sadd.s32 %s72, 1
    %p76 = scmp.eq.s32.totalorder %s10, 1
    %p77 = scmp.ne.s32.totalorder %s72, %s74
    %p78 = scmp.eq.s32.totalorder %s10, 0
    %p79 = por %p77, %p78
    %p80 = scmp.ne.s32.totalorder %s72, %s74
    %p81 = scmp.eq.s32.totalorder %s15, 1
    %p82 = por %p80, %p81
    %p83 = scmp.ne.s32.totalorder %s74, %s75
    %p84 = scmp.eq.s32.totalorder %s15, 0
    %p85 = por %p83, %p84
    %p86 = scmp.ne.s32.totalorder %s74, %s75
    %p87 = scmp.eq.s32.totalorder %s16, 1
    %p88 = por %p86, %p87
    %p90 = scmp.ne.s32.totalorder %s75, %s89
    %p91 = scmp.eq.s32.totalorder %s16, 0
    %p92 = por %p90, %p91
    %s93 = ssub.s32 %s17, %s29
    %s94 = ssub.s32 %s18, %s25
    %s95 = sor.u32 %s93, %s94
    %p96 = scmp.eq.s32.totalorder %s95, 0
    %s98 = sadd.s32 %s97, 1
    %s99 = scalar_select %p96, %s97, %s98
    %p102 = pneg %p96
    %p103 = scmp.eq.s32.totalorder %s10, 1
    %p104 = por %p102, %p103
    %p105 = scmp.ne.s32.totalorder %s97, %s100
    %p106 = scmp.eq.s32.totalorder %s10, 0
    %p107 = por %p105, %p106
    %p108 = scmp.ne.s32.totalorder %s97, %s100
    %p109 = scmp.eq.s32.totalorder %s15, 1
    %p110 = por %p108, %p109
    %p111 = scmp.ne.s32.totalorder %s100, %s101
    %p112 = scmp.eq.s32.totalorder %s15, 0
    %p113 = por %p111, %p112
    %p114 = scmp.ne.s32.totalorder %s100, %s101
    %p115 = scmp.eq.s32.totalorder %s16, 1
    %p116 = por %p114, %p115
    %p118 = scmp.ne.s32.totalorder %s101, %s117
    %p119 = scmp.eq.s32.totalorder %s16, 0
    %p120 = por %p118, %p119
    %s121 = ssub.s32 %s17, %s29
    %s122 = ssub.s32 %s18, %s25
    %s123 = sor.u32 %s121, %s122
    %p124 = scmp.eq.s32.totalorder %s123, 0
    %s126 = sadd.s32 %s125, 1
    %s127 = scalar_select %p124, %s125, %s126
    %p130 = pneg %p124
    %p131 = scmp.eq.s32.totalorder %s10, 1
    %p132 = por %p130, %p131
    %p133 = scmp.ne.s32.totalorder %s125, %s128
    %p134 = scmp.eq.s32.totalorder %s10, 0
    %p135 = por %p133, %p134
    %p136 = scmp.ne.s32.totalorder %s125, %s128
    %p137 = scmp.eq.s32.totalorder %s15, 1
    %p138 = por %p136, %p137
    %p139 = scmp.ne.s32.totalorder %s128, %s129
    %p140 = scmp.eq.s32.totalorder %s15, 0
    %p141 = por %p139, %p140
    %p142 = scmp.ne.s32.totalorder %s128, %s129
    %p143 = scmp.eq.s32.totalorder %s16, 1
    %p144 = por %p142, %p143
    %p146 = scmp.ne.s32.totalorder %s129, %s145
    %p147 = scmp.eq.s32.totalorder %s16, 0
    %p148 = por %p146, %p147
    %p149 = scmp.le.s32.totalorder 1, %s10
    %p150 = scmp.lt.s32.totalorder %s10, 3
    %p151 = pnand %p149, %p150
    %p152 = pneg %p151
    // Predicated region
    $region9: #{conv_emb_forward.3} parent=5 // pred_check
      _
    $region10: #{conv_emb_forward.3} parent=5 // pred_check_branch
      %154 = sbr.rel (%p151) target = $region12
    $region11: #{conv_emb_forward.3} parent=5 // pred_region
      %s155 = ssub.s32 %s10, 1
      // Predicated region
      $region13: #{conv_emb_forward.3} parent=11 // pred_check
        %p156 = pneg %p43
      $region14: #{conv_emb_forward.3} parent=11 // pred_check_branch
        %158 = sbr.rel (%p156) target = $region16
      $region15: #{conv_emb_forward.3} parent=11 // pred_region
        _
      $region16: #{conv_emb_forward.3} parent=11 // pred_fallthru
        _
      // Predicated region
      $region17: #{conv_emb_forward.3} parent=11 // pred_check
        %p159 = pneg %p64
      $region18: #{conv_emb_forward.3} parent=11 // pred_check_branch
        %161 = sbr.rel (%p159) target = $region20
      $region19: #{conv_emb_forward.3} parent=11 // pred_region
        _
      $region20: #{conv_emb_forward.3} parent=11 // pred_fallthru
        _
      // Predicated region
      $region21: #{conv_emb_forward.3} parent=11 // pred_check
        %p162 = pneg %p85
      $region22: #{conv_emb_forward.3} parent=11 // pred_check_branch
        %164 = sbr.rel (%p162) target = $region24
      $region23: #{conv_emb_forward.3} parent=11 // pred_region
        _
      $region24: #{conv_emb_forward.3} parent=11 // pred_fallthru
        _
    $region12: #{conv_emb_forward.3} parent=5 // pred_fallthru
      _
    %p165 = scmp.lt.s32.totalorder %s10, 2
    // Predicated region
    $region25: #{conv_emb_forward.3} parent=5 // pred_check
      %p166 = pneg %p165
    $region26: #{conv_emb_forward.3} parent=5 // pred_check_branch
      %168 = sbr.rel (%p166) target = $region28
    $region27: #{conv_emb_forward.3} parent=5 // pred_region
      // Predicated region
      $region29: #{conv_emb_forward.3} parent=27 // pred_check
        %p169 = pneg %p107
      $region30: #{conv_emb_forward.3} parent=27 // pred_check_branch
        %171 = sbr.rel (%p169) target = $region32
      $region31: #{conv_emb_forward.3} parent=27 // pred_region
        %s172 = smul.u32 2, %s18
        %p173 = scmp.lt.s32.totalorder %s17, 1
        %s174 = scalar_select %p173, %s17, 1
        %p175 = scmp.lt.s32.totalorder %s172, 1
        %s176 = scalar_select %p175, %s172, 1
        %s177 = smul.addr %s174, 2
        %s178 = sadd.s32 %s176, %s177
        %s179 = smul.addr %s178, 4
        %s180 = scalar_lea.vmem %s3, %s179
        %s181 = smul.u32 2, %s18
      $region32: #{conv_emb_forward.3} parent=27 // pred_fallthru
        _
    $region28: #{conv_emb_forward.3} parent=5 // pred_fallthru
      _
    %p182 = scmp.le.s32.totalorder 1, %s10
    %p183 = scmp.lt.s32.totalorder %s10, 3
    %p184 = pnand %p182, %p183
    %p185 = pneg %p184
    // Predicated region
    $region33: #{conv_emb_forward.3} parent=5 // pred_check
      _
    $region34: #{conv_emb_forward.3} parent=5 // pred_check_branch
      %187 = sbr.rel (%p184) target = $region36
    $region35: #{conv_emb_forward.3} parent=5 // pred_region
      %s188 = ssub.s32 %s10, 1
      %p189 = pneg %p43
      %p190 = pneg %p40
      %p191 = pneg %p64
      %p192 = pneg %p61
      %p193 = pneg %p85
      %p194 = pneg %p82
      %s195 = smul.u32 2, %s20
      %p196 = scmp.lt.s32.totalorder %s19, 1
      %s197 = scalar_select %p196, %s19, 1
      %p198 = scmp.lt.s32.totalorder %s195, 1
      %s199 = scalar_select %p198, %s195, 1
      %s200 = smul.addr %s197, 2
      %s201 = sadd.s32 %s199, %s200
      %s202 = smul.addr %s201, 4
      %s203 = scalar_lea.vmem %s3, %s202
      %p204 = pneg %p113
      %p205 = pneg %p110
      %p206 = pneg %p141
      %p207 = pneg %p138
      %s208 = smul.u32 2, %s20
      %p209 = scmp.lt.s32.totalorder %s19, 1
      %s210 = scalar_select %p209, %s19, 1
      %p211 = scmp.lt.s32.totalorder %s208, 1
      %s212 = scalar_select %p211, %s208, 1
      %s213 = smul.addr %s210, 2
      %s214 = sadd.s32 %s212, %s213
      %s215 = smul.addr %s214, 8
      %s216 = scalar_lea.vmem %s4, %s215
      %s217 = smul.u32 2, %s20
      %p218 = scmp.lt.s32.totalorder %s19, 1
      %s219 = scalar_select %p218, %s19, 1
      %p220 = scmp.lt.s32.totalorder %s217, 1
      %s221 = scalar_select %p220, %s217, 1
      %s222 = smul.addr %s219, 2
      %s223 = sadd.s32 %s221, %s222
      %s224 = smul.addr %s223, 4
      %s225 = scalar_lea.vmem %s3, %s224
      %s226 = smul.u32 2, %s20
      %s227 = smul.u32 2, %s20
      %p228 = scmp.lt.s32.totalorder %s19, 1
      %s229 = scalar_select %p228, %s19, 1
      %p230 = scmp.lt.s32.totalorder %s227, 1
      %s231 = scalar_select %p230, %s227, 1
      %s232 = smul.addr %s229, 2
      %s233 = sadd.s32 %s231, %s232
      %s234 = smul.addr %s233, 8
      %s235 = scalar_lea.vmem %s4, %s234
      %s236 = smul.u32 2, %s20
      %v237 = vld [vmem:[%s0] sm:$0xff]
      %v238 = vld [vmem:[%s225] sm:$0xff]
      %v240 = vcombine.high %v238, %v238
      %vm241 = vcmask 31744
      %v243 = vsel %vm241, %v237, 0
      %vm245 = vcmask 1043456
      %v246 = vsel %vm245, %v238, 0
      %v248 = vsel %vm245, %v240, 0
      %250 = vmatprep.subr.mxu0 %v248
      %251 = vmatpush1.msra.mxu0 %v246
      %252 = vmatprep.subr.mxu0 0.0
      %253 = vmatpush1.msra.mxu0 0.0
      %254 = vmatprep.subr.mxu0 0.0
      %255 = vmatpush1.msra.mxu0 0.0
      %256 = vmatprep.subr.mxu0 0.0
      %257 = vmatpush1.msra.mxu0 0.0
      %258 = vmatprep.subr.mxu0 0.0
      %259 = vmatpush1.msra.mxu0 0.0
      %260 = vmatprep.subr.mxu0 0.0
      %261 = vmatpush1.msra.mxu0 0.0
      %262 = vmatprep.subr.mxu0 0.0
      %263 = vmatpush1.msra.mxu0 0.0
      %264 = vmatprep.subr.mxu0 0.0
      %265 = vmatpush1.msra.mxu0 0.0
      %266 = vmatprep.subr.mxu0 0.0
      %267 = vmatpush1.msra.mxu0 0.0
      %268 = vmatprep.subr.mxu0 0.0
      %269 = vmatpush1.msra.mxu0 0.0
      %270 = vmatprep.subr.mxu0 0.0
      %271 = vmatpush1.msra.mxu0 0.0
      %272 = vmatprep.subr.mxu0 0.0
      %273 = vmatpush1.msra.mxu0 0.0
      %274 = vmatprep.subr.mxu0 0.0
      %275 = vmatpush1.msra.mxu0 0.0
      %276 = vmatprep.subr.mxu0 0.0
      %277 = vmatpush1.msra.mxu0 0.0
      %278 = vmatprep.subr.mxu0 0.0
      %279 = vmatpush1.msra.mxu0 0.0
      %280 = vmatprep.subr.mxu0 0.0
      %281 = vmatpush1.msra.mxu0 0.0
      %282 = vmatprep.subr.mxu0 0.0
      %283 = vmatpush1.msra.mxu0 0.0
      %284 = vmatprep.subr.mxu0 0.0
      %285 = vmatpush1.msra.mxu0 0.0
      %286 = vmatprep.subr.mxu0 0.0
      %287 = vmatpush1.msra.mxu0 0.0
      %288 = vmatprep.subr.mxu0 0.0
      %289 = vmatpush1.msra.mxu0 0.0
      %290 = vmatprep.subr.mxu0 0.0
      %291 = vmatpush1.msra.mxu0 0.0
      %292 = vmatprep.subr.mxu0 0.0
      %293 = vmatpush1.msra.mxu0 0.0
      %294 = vmatprep.subr.mxu0 0.0
      %295 = vmatpush1.msra.mxu0 0.0
      %296 = vmatprep.subr.mxu0 0.0
      %297 = vmatpush1.msra.mxu0 0.0
      %298 = vmatprep.subr.mxu0 0.0
      %299 = vmatpush1.msra.mxu0 0.0
      %300 = vmatprep.subr.mxu0 0.0
      %301 = vmatpush1.msra.mxu0 0.0
      %302 = vmatprep.subr.mxu0 0.0
      %303 = vmatpush1.msra.mxu0 0.0
      %304 = vmatprep.subr.mxu0 0.0
      %305 = vmatpush1.msra.mxu0 0.0
      %306 = vmatprep.subr.mxu0 0.0
      %307 = vmatpush1.msra.mxu0 0.0
      %308 = vmatprep.subr.mxu0 0.0
      %309 = vmatpush1.msra.mxu0 0.0
      %310 = vmatprep.subr.mxu0 0.0
      %311 = vmatpush1.msra.mxu0 0.0
      %312 = vmatprep.subr.mxu0 0.0
      %313 = vmatpush1.msra.mxu0 0.0
      %314 = vmatprep.mubr.f32.mxu0 0.0
      %315 = vmatmul.mubr.f32.gmra.mrb[0].mxu0 %v243
      %v316 = vpop.f32.mrb[0].mxu0
      %v317 = vadd.f32 0.0, %v316
      %v318 = vpop.f32.mrb[0].mxu0
      %v319 = vadd.f32 0.0, %v318
      %320 = vdwg.mxu0
      %v321 = vld [vmem:[%s1] sm:$0xff]
      %323 = vset.pattern.permute.xlu0 0
      %324 = vperm.xlu0 %323, %v321
      %v325 = vpop.permute.xlu0 %324
      %v327 = vmul.f32 %v317, %v325
      %v328 = vmul.f32 %v319, %v325
      %v329 = vld [vmem:[%s2] sm:$0xff]
      %331 = vset.pattern.permute.xlu0 0
      %332 = vperm.xlu0 %331, %v329
      %v333 = vpop.permute.xlu0 %332
      %v335 = vadd.f32 %v327, %v333
      %v336 = vadd.f32 %v328, %v333
      %v337 = vmax.f32 %v335, 0.0
      %v338 = vmax.f32 %v336, 0.0
      %339 = vst [vmem:[%s235] sm:$0xff] %v337
      %340 = vst [vmem:[%s235 + $0x8] sm:$0xff] %v338
      %s341 = smul.u32 2, %s20
      %p342 = scmp.lt.s32.totalorder %s19, 1
      %s343 = scalar_select %p342, %s19, 1
      %p344 = scmp.lt.s32.totalorder %s341, 1
      %s345 = scalar_select %p344, %s341, 1
      %s346 = smul.addr %s343, 2
      %s347 = sadd.s32 %s345, %s346
      %s348 = smul.addr %s347, 8
      %s349 = scalar_lea.vmem %s4, %s348
      // Predicated region
      $region37: #{conv_emb_forward.3} parent=35 // pred_check
        %p350 = pneg %p138
      $region38: #{conv_emb_forward.3} parent=35 // pred_check_branch
        %352 = sbr.rel (%p350) target = $region40
      $region39: #{conv_emb_forward.3} parent=35 // pred_region
        %s353 = smul.u32 2, %s20
      $region40: #{conv_emb_forward.3} parent=35 // pred_fallthru
        _
    $region36: #{conv_emb_forward.3} parent=5 // pred_fallthru
      _
    %p354 = scmp.le.s32.totalorder 2, %s10
    // Predicated region
    $region41: #{conv_emb_forward.3} parent=5 // pred_check
      %p355 = pneg %p354
    $region42: #{conv_emb_forward.3} parent=5 // pred_check_branch
      %357 = sbr.rel (%p355) target = $region44
    $region43: #{conv_emb_forward.3} parent=5 // pred_region
      %s358 = ssub.s32 %s10, 2
      // Predicated region
      $region45: #{conv_emb_forward.3} parent=43 // pred_check
        %p359 = pneg %p144
      $region46: #{conv_emb_forward.3} parent=43 // pred_check_branch
        %361 = sbr.rel (%p359) target = $region48
      $region47: #{conv_emb_forward.3} parent=43 // pred_region
        %s362 = smul.u32 2, %s22
        %p363 = scmp.lt.s32.totalorder %s21, 1
        %s364 = scalar_select %p363, %s21, 1
        %p365 = scmp.lt.s32.totalorder %s362, 1
        %s366 = scalar_select %p365, %s362, 1
        %s367 = smul.addr %s364, 2
        %s368 = sadd.s32 %s366, %s367
        %s369 = smul.addr %s368, 8
        %s370 = scalar_lea.vmem %s4, %s369
      $region48: #{conv_emb_forward.3} parent=43 // pred_fallthru
        _
    $region44: #{conv_emb_forward.3} parent=5 // pred_fallthru
      _
  $region6: #{conv_emb_forward.3} parent=0 // loop_footer
    %s14 = sadd.s32 1, %s10
  $region7: #{conv_emb_forward.3} parent=0 // loop_footer_branch
    %9 = sbr.rel target = $region3
  $region8: #{conv_emb_forward.3} parent=0 // loop_exit
    _

</llo_original>
